<compile_context>
chip_gen: v6e
topology: v6e:2x2x1
jax: 0.10.0
libtpu: 0.0.40
codegen_flags: <defaults>
</compile_context>

<pallas_src>
import math
import functools

import jax
import jax.numpy as jnp
from jax import lax
from jax.experimental import pallas as pl
from jax.experimental.pallas import tpu as pltpu


# ----------------------------------------------------------------------------
# helpers
# ----------------------------------------------------------------------------
def _round_up(x, m):
    return (x + m - 1) // m * m


def _pick_seq_tile(dim, target, align):
    """Largest tile <= target that is a multiple of `align` and exactly divides
    `dim`.  Falls back to the full dim (always a legal block) if none exists."""
    if dim <= target:
        return dim
    t = (target // align) * align
    while t >= align:
        if dim % t == 0:
            return t
        t -= align
    return dim


# ----------------------------------------------------------------------------
# Tiled linear (x @ W + b) kernel
# ----------------------------------------------------------------------------
def _linear_kernel(x_ref, w_ref, b_ref, o_ref, acc_ref):
    # blocks: x (tm, tk), w (tk, tn), b (1, tn), o (tm, tn); K innermost grid axis.
    @pl.when(pl.program_id(2) == 0)
    def _init():
        acc_ref[...] = jnp.broadcast_to(b_ref[...].astype(jnp.float32), acc_ref.shape)

    acc_ref[...] += jnp.dot(x_ref[...], w_ref[...],
                            preferred_element_type=jnp.float32)

    @pl.when(pl.program_id(2) == pl.num_programs(2) - 1)
    def _store():
        o_ref[...] = acc_ref[...].astype(o_ref.dtype)


def pallas_linear(x2d, w, b, *, tm=256, tn=256, tk=512):
    """x2d: [M, K], w: [K, N], b: [N] -> [M, N].  Tiled, pipelined, f32 accumulation.
    Tiles are either the full dim or (8,128)-aligned with zero padding."""
    M, K = x2d.shape
    K2, N = w.shape
    assert K == K2
    out_dtype = x2d.dtype
    itemsize = jnp.dtype(out_dtype).itemsize

    if M <= tm:
        tm_, Mp = M, M
    else:
        tm_, Mp = tm, _round_up(M, tm)
    if N <= tn:
        tn_, Np = N, N
    else:
        tn_, Np = tn, _round_up(N, tn)
    if K <= tk:
        tk_, Kp = K, K
    else:
        tk_, Kp = tk, _round_up(K, tk)

    xp = x2d if (Mp == M and Kp == K) else jnp.pad(x2d, ((0, Mp - M), (0, Kp - K)))
    wp = w if (Kp == K and Np == N) else jnp.pad(w, ((0, Kp - K), (0, Np - N)))
    bp = (b if Np == N else jnp.pad(b, (0, Np - N))).reshape(1, Np)

    grid = (Mp // tm_, Np // tn_, Kp // tk_)

    vmem = ((tm_ * tk_ + tk_ * tn_) * itemsize * 2     # double-buffered x, w blocks
            + tn_ * itemsize * 2                       # bias block
            + tm_ * tn_ * itemsize * 2                 # output block
            + tm_ * tn_ * 4)                           # f32 accumulator scratch
    vmem_limit = min(max(2 * vmem + (4 << 20), 32 << 20), 64 << 20)

    out = pl.pallas_call(
        _linear_kernel,
        out_shape=jax.ShapeDtypeStruct((Mp, Np), out_dtype),
        grid_spec=pltpu.PrefetchScalarGridSpec(
            num_scalar_prefetch=0,
            grid=grid,
            in_specs=[
                pl.BlockSpec((tm_, tk_), lambda i, j, k: (i, k)),
                pl.BlockSpec((tk_, tn_), lambda i, j, k: (k, j)),
                pl.BlockSpec((1, tn_), lambda i, j, k: (0, j)),
            ],
            out_specs=pl.BlockSpec((tm_, tn_), lambda i, j, k: (i, j)),
            scratch_shapes=[pltpu.VMEM((tm_, tn_), jnp.float32)],
        ),
        compiler_params=pltpu.CompilerParams(
            dimension_semantics=("parallel", "parallel", "arbitrary"),
            vmem_limit_bytes=vmem_limit),
    )(xp, wp, bp)
    if Mp != M or Np != N:
        out = out[:M, :N]
    return out


# ----------------------------------------------------------------------------
# Flash-style multi-head attention kernel
#   grid = (batch, query tiles, kv tiles), kv axis last ("arbitrary")
# ----------------------------------------------------------------------------
def _flash_mha_kernel(*refs, num_heads, masked):
    q_ref, k_ref, v_ref = refs[0], refs[1], refs[2]
    if masked:
        mask_ref = refs[3]
        o_ref, m_sc, l_sc, acc_sc = refs[4:]
    else:
        mask_ref = None
        o_ref, m_sc, l_sc, acc_sc = refs[3:]

    ki = pl.program_id(2)

    @pl.when(ki == 0)
    def _init():
        m_sc[...] = jnp.full_like(m_sc, -jnp.inf)
        l_sc[...] = jnp.zeros_like(l_sc)
        acc_sc[...] = jnp.zeros_like(acc_sc)

    d_model = q_ref.shape[-1]
    d_k = d_model // num_heads
    scale = 1.0 / math.sqrt(float(d_k))

    # Hoisted per grid step (not per head): scale folded into q once, mask predicate once.
    q = q_ref[0] * jnp.asarray(scale, dtype=q_ref.dtype)     # [tq, D]
    k = k_ref[0]                                             # [tk, D]
    v = v_ref[0]                                             # [tk, D]
    keep = (mask_ref[0].astype(jnp.float32) != 0.0) if masked else None  # [tq, tk]
    neg_big = jnp.float32(-1e9)

    for h in range(num_heads):                               # static unroll over heads
        lo, hi = h * d_k, (h + 1) * d_k
        # scores = (q/sqrt(dk))_h @ k_h^T, contracting last dims (no explicit k.T)
        s = lax.dot_general(q[:, lo:hi], k[:, lo:hi],
                            (((1,), (1,)), ((), ())),
                            preferred_element_type=jnp.float32)          # [tq, tk]
        if masked:
            s = jnp.where(keep, s, neg_big)
        m_prev = m_sc[h]                                                  # [tq, 1]
        m_new = jnp.maximum(m_prev, jnp.max(s, axis=-1, keepdims=True))
        alpha = jnp.exp(m_prev - m_new)
        p = jnp.exp(s - m_new)
        l_sc[h] = alpha * l_sc[h] + jnp.sum(p, axis=-1, keepdims=True)
        acc_sc[:, lo:hi] = alpha * acc_sc[:, lo:hi] + jnp.dot(
            p.astype(v.dtype), v[:, lo:hi], preferred_element_type=jnp.float32)
        m_sc[h] = m_new

    @pl.when(ki == pl.num_programs(2) - 1)
    def _finalize():
        for h in range(num_heads):
            lo, hi = h * d_k, (h + 1) * d_k
            acc_sc[:, lo:hi] = acc_sc[:, lo:hi] * pl.reciprocal(l_sc[h], approx=True)
        o_ref[0] = acc_sc[...].astype(o_ref.dtype)           # single lane-dense store


def pallas_flash_attention(q_arr, k_arr, v_arr, mask_i8, *, num_heads, d_model,
                           q_col=0, k_col=0, v_col=0, tq=256, tk=512):
    """Flash-style MHA over [B, S, D] activations.
    q_arr/k_arr/v_arr may be the SAME packed [B, S, 3D] array (column-block views
    selected with q_col/k_col/v_col, zero-copy) or three separate [B, S, D] arrays.
    mask_i8: None, [1, Sq, Sk] (batch-shared, kept resident) or [B, Sq, Sk] int8."""
    B, Sq = q_arr.shape[0], q_arr.shape[1]
    Sk = k_arr.shape[1]
    masked = mask_i8 is not None
    itemsize = jnp.dtype(q_arr.dtype).itemsize

    tq_ = _pick_seq_tile(Sq, tq, 8)
    # with a mask the kv tile is the mask block's lane axis -> needs a 128-multiple
    tk_ = _pick_seq_tile(Sk, tk, 128 if masked else 8)
    grid = (B, Sq // tq_, Sk // tk_)

    in_specs = [
        pl.BlockSpec((1, tq_, d_model), lambda b, qi, ki: (b, qi, q_col)),
        pl.BlockSpec((1, tk_, d_model), lambda b, qi, ki: (b, ki, k_col)),
        pl.BlockSpec((1, tk_, d_model), lambda b, qi, ki: (b, ki, v_col)),
    ]
    args = [q_arr, k_arr, v_arr]
    if masked:
        if mask_i8.shape[0] == 1:
            mask_map = lambda b, qi, ki: (0, qi, ki)    # batch-shared: block resident
        else:
            mask_map = lambda b, qi, ki: (b, qi, ki)
        in_specs.append(pl.BlockSpec((1, tq_, tk_), mask_map))
        args.append(mask_i8)

    vmem = ((tq_ + 2 * tk_) * d_model * itemsize * 2     # q,k,v blocks double-buffered
            + tq_ * d_model * itemsize * 2               # output block
            + (tq_ * tk_ * 2 if masked else 0)           # int8 mask block
            + (2 * num_heads * tq_ + tq_ * d_model) * 4  # m/l/acc scratch
            + tq_ * tk_ * 4 * 8)                         # score/prob temporaries
    vmem_limit = min(max(2 * vmem + (4 << 20), 32 << 20), 64 << 20)

    kernel = functools.partial(_flash_mha_kernel, num_heads=num_heads, masked=masked)
    return pl.pallas_call(
        kernel,
        out_shape=jax.ShapeDtypeStruct((B, Sq, d_model), q_arr.dtype),
        grid_spec=pltpu.PrefetchScalarGridSpec(
            num_scalar_prefetch=0,
            grid=grid,
            in_specs=in_specs,
            out_specs=pl.BlockSpec((1, tq_, d_model), lambda b, qi, ki: (b, qi, 0)),
            scratch_shapes=[
                pltpu.VMEM((num_heads, tq_, 1), jnp.float32),   # running max / head
                pltpu.VMEM((num_heads, tq_, 1), jnp.float32),   # running denom / head
                pltpu.VMEM((tq_, d_model), jnp.float32),        # context accumulator
            ],
        ),
        compiler_params=pltpu.CompilerParams(
            dimension_semantics=("parallel", "parallel", "arbitrary"),
            vmem_limit_bytes=vmem_limit),
    )(*args)


# ----------------------------------------------------------------------------
# Module wrapper
# ----------------------------------------------------------------------------
class MultiHeadedAttentionPallas:
    """JAX/Pallas equivalent of the PyTorch MultiHeadedAttention module (forward)."""

    def __init__(self, h, d_model, key, dropout=0.1, param_dtype=jnp.float32):
        assert d_model % h == 0
        self.h = h
        self.d_k = d_model // h
        self.d_model = d_model
        self.dropout = dropout          # unused (see TODO at top of file)
        self.param_dtype = param_dtype  # store weights in compute dtype (bf16-friendly)

        # 4 Linear(d_model, d_model) layers: q, k, v, out projections.
        bound = 1.0 / math.sqrt(d_model)
        keys = jax.random.split(key, 8)
        self.weights, self.biases = [], []
        for i in range(4):
            w = jax.random.uniform(keys[2 * i], (d_model, d_model),
                                   minval=-bound, maxval=bound,
                                   dtype=jnp.float32).astype(param_dtype)
            b = jax.random.uniform(keys[2 * i + 1], (d_model,),
                                   minval=-bound, maxval=bound,
                                   dtype=jnp.float32).astype(param_dtype)
            self.weights.append(w)
            self.biases.append(b)

        # Pre-fused QKV parameters for the self-attention fast path
        # (one [D, 3D] matmul -> activation read from HBM once).
        self.w_qkv = jnp.concatenate(self.weights[:3], axis=1)    # [D, 3D]
        self.b_qkv = jnp.concatenate(self.biases[:3], axis=0)     # [3D]

    def __call__(self, query, key, value, mask=None, *, self_attention=None):
        B, Sq, D = query.shape
        Sk = key.shape[1]

        mask_i8 = None
        if mask is not None:
            m = mask
            if m.ndim == 2:
                m = m[None]            # [1, Sq, Sk]  (batch-shared, stays resident)
            elif m.ndim == 4:
                m = m[:, 0]            # [B, Sq, Sk]  (post-unsqueeze layout)
            m = jnp.broadcast_to(m, (m.shape[0], Sq, Sk))
            # int8 "keep" mask (1 = keep, 0 = fill with -1e9): 4x less DMA than f32.
            mask_i8 = (m != 0).astype(jnp.int8)

        # Structural flag preferred over object identity (which breaks under jit tracing).
        if self_attention is None:
            self_attention = (query is key) and (key is value)

        if self_attention:
            # Fused QKV projection: one matmul, activation read from HBM once.
            qkv = pallas_linear(query.reshape(B * Sq, D), self.w_qkv, self.b_qkv)
            qkv = qkv.reshape(B, Sq, 3 * D)
            if D % 128 == 0:
                # zero-copy: pass the packed array three times with column-block views
                ctx = pallas_flash_attention(qkv, qkv, qkv, mask_i8,
                                             num_heads=self.h, d_model=D,
                                             q_col=0, k_col=1, v_col=2)
            else:
                # small d_model: D-wide column blocks would violate (8,128); split instead
                q = qkv[..., :D]
                k = qkv[..., D:2 * D]
                v = qkv[..., 2 * D:]
                ctx = pallas_flash_attention(q, k, v, mask_i8,
                                             num_heads=self.h, d_model=D)
        else:
            q = pallas_linear(query.reshape(B * Sq, D),
                              self.weights[0], self.biases[0]).reshape(B, Sq, D)
            k = pallas_linear(key.reshape(B * Sk, D),
                              self.weights[1], self.biases[1]).reshape(B, Sk, D)
            v = pallas_linear(value.reshape(B * Sk, D),
                              self.weights[2], self.biases[2]).reshape(B, Sk, D)
            ctx = pallas_flash_attention(q, k, v, mask_i8,
                                         num_heads=self.h, d_model=D)

        out = pallas_linear(ctx.reshape(B * Sq, D), self.weights[3], self.biases[3])
        return out.reshape(B, Sq, D)


# ----------------------------------------------------------------------------
# Pure-JAX reference (mirrors the PyTorch module exactly, for sanity checking)
# ----------------------------------------------------------------------------
def reference_mha(module, query, key, value, mask=None):
    B, Sq, D = query.shape
    h, d_k = module.h, module.d_k

    def lin(x, w, b):
        return x @ w + b

    def split(x):
        return jnp.transpose(x.reshape(B, -1, h, d_k), (0, 2, 1, 3))

    q = split(lin(query, module.weights[0], module.biases[0]))
    k = split(lin(key,   module.weights[1], module.biases[1]))
    v = split(lin(value, module.weights[2], module.biases[2]))
    scores = jnp.einsum("bhqd,bhkd->bhqk", q, k) / math.sqrt(d_k)
    if mask is not None:
        m = mask
        if m.ndim == 2:
            m = m[None, None]
        elif m.ndim == 3:
            m = m[:, None]
        scores = jnp.where(m == 0, -1e9, scores)
    p = jax.nn.softmax(scores, axis=-1)
    x = jnp.einsum("bhqk,bhkd->bhqd", p, v)
    x = jnp.transpose(x, (0, 2, 1, 3)).reshape(B, Sq, h * d_k)
    return lin(x, module.weights[3], module.biases[3])


# ----------------------------------------------------------------------------
# Main
# ----------------------------------------------------------------------------
if __name__ == "__main__":
    B, S, H, D_MODEL = 2, 8, 4, 32

    root = jax.random.PRNGKey(0)
    k_params, k_x, k_q, k_k, k_v = jax.random.split(root, 5)

    mha = MultiHeadedAttentionPallas(h=H, d_model=D_MODEL, key=k_params)

    # 1) self-attention fast path (fused QKV) with a batch-shared causal mask.
    x = jax.random.normal(k_x, (B, S, D_MODEL), dtype=jnp.float32)
    causal = jnp.tril(jnp.ones((S, S), dtype=jnp.float32))   # 2-D -> kept as [1,S,S]
    out1 = jax.block_until_ready(mha(x, x, x, mask=causal, self_attention=True))
    ref1 = reference_mha(mha, x, x, x, mask=causal)
    assert out1.shape == (B, S, D_MODEL), out1.shape
    assert jnp.allclose(out1, ref1, atol=5e-3, rtol=5e-3), "self-attn path mismatch"

    # 2) general path: distinct query / key / value, no mask.
    q_in = jax.random.normal(k_q, (B, S, D_MODEL), dtype=jnp.float32)
    k_in = jax.random.normal(k_k, (B, S, D_MODEL), dtype=jnp.float32)
    v_in = jax.random.normal(k_v, (B, S, D_MODEL), dtype=jnp.float32)
    out2 = jax.block_until_ready(mha(q_in, k_in, v_in, mask=None))
    ref2 = reference_mha(mha, q_in, k_in, v_in, mask=None)
    assert out2.shape == (B, S, D_MODEL), out2.shape
    assert jnp.allclose(out2, ref2, atol=5e-3, rtol=5e-3), "general path mismatch"

    print("KERNEL_OK")
</pallas_src>

<mosaic_0001>
module attributes {stable_mosaic.version = 11 : i64} {
  func.func @_linear_kernel(%arg0: i32, %arg1: i32, %arg2: i32, %arg3: memref<16x32xf32, #tpu.memory_space<vmem>>, %arg4: memref<32x96xf32, #tpu.memory_space<vmem>>, %arg5: memref<1x96xf32, #tpu.memory_space<vmem>>, %arg6: memref<16x96xf32, #tpu.memory_space<vmem>>, %arg7: memref<16x96xf32, #tpu.memory_space<vmem>>) attributes {dimension_semantics = [#tpu.dimension_semantics<parallel>, #tpu.dimension_semantics<parallel>, #tpu.dimension_semantics<arbitrary>], iteration_bounds = array<i64: 1, 1, 1>, scalar_prefetch = 0 : i64, scratch_operands = 1 : i64, tpu.core_type = #tpu.core_type<tc>, window_params = [{transform_indices = @transform_0, window_bounds = array<i64: 16, 32>}, {transform_indices = @transform_1, window_bounds = array<i64: 32, 96>}, {transform_indices = @transform_2, window_bounds = array<i64: 1, 96>}, {transform_indices = @transform_3, window_bounds = array<i64: 16, 96>}]} {
    %c0_i32 = arith.constant 0 : i32
    %0 = arith.cmpi eq, %arg2, %c0_i32 : i32
    %1 = arith.extui %0 : i1 to i32
    %c0_i32_0 = arith.constant 0 : i32
    %2 = arith.cmpi ne, %1, %c0_i32_0 : i32
    scf.if %2 {
      %c0_10 = arith.constant 0 : index
      %c0_11 = arith.constant 0 : index
      %12 = vector.load %arg5[%c0_10, %c0_11] : memref<1x96xf32, #tpu.memory_space<vmem>>, vector<1x96xf32>
      %13 = vector.shape_cast %12 : vector<1x96xf32> to vector<1x96xf32>
      %14 = vector.broadcast %13 : vector<1x96xf32> to vector<16x96xf32>
      %c0_12 = arith.constant 0 : index
      %c0_13 = arith.constant 0 : index
      %15 = vector.load %arg7[%c0_12, %c0_13] : memref<16x96xf32, #tpu.memory_space<vmem>>, vector<16x96xf32>
      tpu.vector_store %arg7[%c0_12, %c0_13], %14 {strides = array<i32>} : memref<16x96xf32, #tpu.memory_space<vmem>>, vector<16x96xf32>,
    } else {
    }
    %c0 = arith.constant 0 : index
    %c0_1 = arith.constant 0 : index
    %3 = vector.load %arg7[%c0, %c0_1] : memref<16x96xf32, #tpu.memory_space<vmem>>, vector<16x96xf32>
    %c0_2 = arith.constant 0 : index
    %c0_3 = arith.constant 0 : index
    %4 = vector.load %arg3[%c0_2, %c0_3] : memref<16x32xf32, #tpu.memory_space<vmem>>, vector<16x32xf32>
    %c0_4 = arith.constant 0 : index
    %c0_5 = arith.constant 0 : index
    %5 = vector.load %arg4[%c0_4, %c0_5] : memref<32x96xf32, #tpu.memory_space<vmem>>, vector<32x96xf32>
    %cst = arith.constant dense<0.000000e+00> : vector<16x96xf32>
    %6 = tpu.matmul %4, %5, %cst {dimension_numbers = #tpu.dot_dimension_numbers<[1], [0], [0], [1], [0, 0, 1, 1], [], []>} : vector<16x32xf32>, vector<32x96xf32>, vector<16x96xf32> -> vector<16x96xf32>
    %7 = arith.addf %3, %6 : vector<16x96xf32>
    %c0_6 = arith.constant 0 : index
    %c0_7 = arith.constant 0 : index
    %8 = vector.load %arg7[%c0_6, %c0_7] : memref<16x96xf32, #tpu.memory_space<vmem>>, vector<16x96xf32>
    tpu.vector_store %arg7[%c0_6, %c0_7], %7 {strides = array<i32>} : memref<16x96xf32, #tpu.memory_space<vmem>>, vector<16x96xf32>,
    %c0_i32_8 = arith.constant 0 : i32
    %9 = arith.cmpi eq, %arg2, %c0_i32_8 : i32
    %10 = arith.extui %9 : i1 to i32
    %c0_i32_9 = arith.constant 0 : i32
    %11 = arith.cmpi ne, %10, %c0_i32_9 : i32
    scf.if %11 {
      %c0_10 = arith.constant 0 : index
      %c0_11 = arith.constant 0 : index
      %12 = vector.load %arg7[%c0_10, %c0_11] : memref<16x96xf32, #tpu.memory_space<vmem>>, vector<16x96xf32>
      %c0_12 = arith.constant 0 : index
      %c0_13 = arith.constant 0 : index
      %13 = vector.load %arg6[%c0_12, %c0_13] : memref<16x96xf32, #tpu.memory_space<vmem>>, vector<16x96xf32>
      tpu.vector_store %arg6[%c0_12, %c0_13], %12 {strides = array<i32>} : memref<16x96xf32, #tpu.memory_space<vmem>>, vector<16x96xf32>,
    } else {
    }
    return
  }
  func.func @transform_0(%arg0: i32, %arg1: i32, %arg2: i32) -> (i32, i32) {
    %c0_i32 = arith.constant 0 : i32
    return %arg0, %arg2 : i32, i32
  }
  func.func @transform_1(%arg0: i32, %arg1: i32, %arg2: i32) -> (i32, i32) {
    %c0_i32 = arith.constant 0 : i32
    return %arg2, %arg1 : i32, i32
  }
  func.func @transform_2(%arg0: i32, %arg1: i32, %arg2: i32) -> (i32, i32) {
    %c0_i32 = arith.constant 0 : i32
    %c0_i32_0 = arith.constant 0 : i32
    return %c0_i32, %arg1 : i32, i32
  }
  func.func @transform_3(%arg0: i32, %arg1: i32, %arg2: i32) -> (i32, i32) {
    %c0_i32 = arith.constant 0 : i32
    return %arg0, %arg1 : i32, i32
  }
}

</mosaic_0001>

<llo_original>
// kernel: tpu_custom_call.1
$region0: #{tpu_custom_call.1}
  #allocation0 [shape = 'u32[]', space=smem, size = 0x4, offset = 0x4, fixed_abs, tag = 'smem constant byte address 0x4 - core index']
  #allocation1 [shape = 'u32[144,128]{1,0:T(1,128)}', space=vmem, size = 0x12000, scoped, tag = 'internal scratch']
  #allocation2 [shape = 'f32[16,96]{1,0:T(8,128)}', space=vmem, size = 0x2000, scoped, tag = 'scratch operand']
  %s0 = inlined_call_operand.hbm [shape: f32[16,32], index: 0, kind: input, shape index: {}]
  %s1 = inlined_call_operand.hbm [shape: f32[32,96], index: 1, kind: input, shape index: {}]
  %s2 = inlined_call_operand.vmem [shape: f32[1,96], index: 2, kind: input, shape index: {}]
  %s3 = inlined_call_operand.hbm [shape: f32[16,96], index: 3, kind: output, shape index: {}]
  %s4 = sld [smem:[#allocation0]]
  $region38: #{tpu_custom_call.1} parent=0
    _
  %s6 = ssub.s32 1, %s4
  %s7 = scalar_select 0, %s6, %s4
  $region1: #{tpu_custom_call.1} parent=0
    #allocation3 [shape = 'u8[8192]{0}', space=vmem, size = 0x2000, scoped, tag = 'input window, operand 0, single buffered']
    #allocation4 [shape = 's32[1]{0}', space=sflag, size = 0x4, scoped, tag = 'scoped memory for tpu_custom_call.1']
    #allocation5 [shape = 's32[1]{0}', space=sflag, size = 0x4, scoped, tag = 'scoped memory for tpu_custom_call.1']
    #allocation6 [shape = 'u8[16384]{0}', space=vmem, size = 0x4000, scoped, tag = 'input window, operand 1, single buffered']
    #allocation7 [shape = 's32[1]{0}', space=sflag, size = 0x4, scoped, tag = 'scoped memory for tpu_custom_call.1']
    #allocation8 [shape = 'u8[8192]{0}', space=vmem, size = 0x2000, scoped, tag = 'output window, operand 0, single buffered']
    %8 = vsyncpa [#allocation4], 0
    %9 = vsyncpa [#allocation7], 0
    %10 = vsyncpa [#allocation5], 0
    // Predicated region
    $region2: #{tpu_custom_call.1} parent=1 // pred_check
      _
    $region3: #{tpu_custom_call.1} parent=1 // pred_check_branch
      %12 = sbr.rel (0) target = $region5
    $region4: #{tpu_custom_call.1} parent=1 // pred_region
      %s14 = ssub.s32 256, 256
      %15 = vsyncadd [#allocation4], %s14
      %s16 = sshll.u32 [#allocation3], 4
      %s17 = int_to_ptr.vmem [resolvable:$true] %s16
      %22 = dma.hbm_to_vmem [thread:$0]  %s0, 256, %s17, [#allocation4], 128, 128, 8
    $region5: #{tpu_custom_call.1} parent=1 // pred_fallthru
      _
    // Predicated region
    $region6: #{tpu_custom_call.1} parent=1 // pred_check
      _
    $region7: #{tpu_custom_call.1} parent=1 // pred_check_branch
      %24 = sbr.rel (0) target = $region9
    $region8: #{tpu_custom_call.1} parent=1 // pred_region
      %s26 = ssub.s32 512, 512
      %27 = vsyncadd [#allocation7], %s26
      %s28 = sshll.u32 [#allocation6], 4
      %s29 = int_to_ptr.vmem [resolvable:$true] %s28
      %34 = dma.hbm_to_vmem [thread:$0]  %s1, 512, %s29, [#allocation7], 128, 128, 8
    $region9: #{tpu_custom_call.1} parent=1 // pred_fallthru
      _
    // Predicated region
    $region10: #{tpu_custom_call.1} parent=1 // pred_check
      _
    $region11: #{tpu_custom_call.1} parent=1 // pred_check_branch
      %36 = sbr.rel (0) target = $region13
    $region12: #{tpu_custom_call.1} parent=1 // pred_region
      _
    $region13: #{tpu_custom_call.1} parent=1 // pred_fallthru
      _
    // Predicated region
    $region14: #{tpu_custom_call.1} parent=1 // pred_check
      _
    $region15: #{tpu_custom_call.1} parent=1 // pred_check_branch
      %38 = sbr.rel (0) target = $region17
    $region16: #{tpu_custom_call.1} parent=1 // pred_region
      %39 = dma.done [#allocation4], 256
    $region17: #{tpu_custom_call.1} parent=1 // pred_fallthru
      _
    // Predicated region
    $region18: #{tpu_custom_call.1} parent=1 // pred_check
      _
    $region19: #{tpu_custom_call.1} parent=1 // pred_check_branch
      %41 = sbr.rel (0) target = $region21
    $region20: #{tpu_custom_call.1} parent=1 // pred_region
      %42 = dma.done [#allocation7], 512
    $region21: #{tpu_custom_call.1} parent=1 // pred_fallthru
      _
    %p43 = scmp.eq.s32.totalorder 0, 0
    // Predicated region
    $region22: #{tpu_custom_call.1} parent=1 // pred_check
      %p44 = pneg %p43
    $region23: #{tpu_custom_call.1} parent=1 // pred_check_branch
      %46 = sbr.rel (%p44) target = $region25
    $region24: #{tpu_custom_call.1} parent=1 // pred_region
      %v47 = vld [vmem:[%s2] sm:$0x1]
      %v49 = vlaneseq
      %v50 = vshrl.u32 %v49, 7
      %v51 = vsub.s32 0, %v50
      %v52 = vrot.slane %v47, %v51
      %vm54 = vcmask 785408
      %55 = vst.msk [vmem:[#allocation2] sm:$0xff] %vm54, %v52
      %56 = vst.msk [vmem:[#allocation2 + $0x8] sm:$0xff] %vm54, %v52
    $region25: #{tpu_custom_call.1} parent=1 // pred_fallthru
      _
    %v57 = vld [vmem:[#allocation2] sm:$0xff]
    %v58 = vld [vmem:[#allocation2 + $0x8] sm:$0xff]
    %v59 = vld [vmem:[#allocation3] sm:$0xff]
    %v60 = vld [vmem:[#allocation3 + $0x8] sm:$0xff]
    %v61 = vld [vmem:[#allocation6] sm:$0xff]
    %v62 = vld [vmem:[#allocation6 + $0x8] sm:$0xff]
    %v63 = vld [vmem:[#allocation6 + $0x10] sm:$0xff]
    %v64 = vld [vmem:[#allocation6 + $0x18] sm:$0xff]
    %vm65 = vcmask 261120
    %v67 = vsel %vm65, %v59, 0
    %v70 = vsel %vm65, %v60, 0
    %72 = vmatprep.subr.mxu0 0.0
    %73 = vmatpush1.msra.mxu0 0.0
    %74 = vmatprep.subr.mxu0 0.0
    %75 = vmatpush1.msra.mxu0 0.0
    %76 = vmatprep.subr.mxu0 0.0
    %77 = vmatpush1.msra.mxu0 0.0
    %78 = vmatprep.subr.mxu0 0.0
    %79 = vmatpush1.msra.mxu0 0.0
    %80 = vmatprep.subr.mxu0 0.0
    %81 = vmatpush1.msra.mxu0 0.0
    %82 = vmatprep.subr.mxu0 0.0
    %83 = vmatpush1.msra.mxu0 0.0
    %84 = vmatprep.subr.mxu0 0.0
    %85 = vmatpush1.msra.mxu0 0.0
    %86 = vmatprep.subr.mxu0 0.0
    %87 = vmatpush1.msra.mxu0 0.0
    %88 = vmatprep.subr.mxu0 0.0
    %89 = vmatpush1.msra.mxu0 0.0
    %90 = vmatprep.subr.mxu0 0.0
    %91 = vmatpush1.msra.mxu0 0.0
    %92 = vmatprep.subr.mxu0 0.0
    %93 = vmatpush1.msra.mxu0 0.0
    %94 = vmatprep.subr.mxu0 0.0
    %95 = vmatpush1.msra.mxu0 0.0
    %96 = vmatprep.subr.mxu0 0.0
    %97 = vmatpush1.msra.mxu0 %v64
    %98 = vmatprep.subr.mxu0 0.0
    %99 = vmatpush1.msra.mxu0 %v63
    %100 = vmatprep.subr.mxu0 0.0
    %101 = vmatpush1.msra.mxu0 %v62
    %102 = vmatprep.subr.mxu0 0.0
    %103 = vmatpush1.msra.mxu0 %v61
    %104 = vmatprep.subr.mxu0 0.0
    %105 = vmatpush2.msra.mxu0 0.0
    %106 = vmatprep.subr.mxu0 0.0
    %107 = vmatpush2.msra.mxu0 0.0
    %108 = vmatprep.subr.mxu0 0.0
    %109 = vmatpush2.msra.mxu0 0.0
    %110 = vmatprep.subr.mxu0 0.0
    %111 = vmatpush2.msra.mxu0 0.0
    %112 = vmatprep.subr.mxu0 0.0
    %113 = vmatpush2.msra.mxu0 0.0
    %114 = vmatprep.subr.mxu0 0.0
    %115 = vmatpush2.msra.mxu0 0.0
    %116 = vmatprep.subr.mxu0 0.0
    %117 = vmatpush2.msra.mxu0 0.0
    %118 = vmatprep.subr.mxu0 0.0
    %119 = vmatpush2.msra.mxu0 0.0
    %120 = vmatprep.subr.mxu0 0.0
    %121 = vmatpush2.msra.mxu0 0.0
    %122 = vmatprep.subr.mxu0 0.0
    %123 = vmatpush2.msra.mxu0 0.0
    %124 = vmatprep.subr.mxu0 0.0
    %125 = vmatpush2.msra.mxu0 0.0
    %126 = vmatprep.subr.mxu0 0.0
    %127 = vmatpush2.msra.mxu0 0.0
    %128 = vmatprep.subr.mxu0 0.0
    %129 = vmatpush2.msra.mxu0 0.0
    %130 = vmatprep.subr.mxu0 0.0
    %131 = vmatpush2.msra.mxu0 0.0
    %132 = vmatprep.subr.mxu0 0.0
    %133 = vmatpush2.msra.mxu0 0.0
    %134 = vmatprep.subr.mxu0 0.0
    %135 = vmatpush2.msra.mxu0 0.0
    %136 = vmatprep.mubr.f32.mxu0 0.0
    %137 = vmatmul.mubr.f32.gmra.mxu0 %v67
    %v138 = vpop.f32.mrf.mxu0
    %v139 = vadd.f32 0.0, %v138
    %v140 = vpop.f32.mrf.mxu0
    %141 = vmatprep.mubr.f32.mxu0 0.0
    %142 = vmatmul.mubr.f32.gmra.mxu0 %v70
    %v143 = vpop.f32.mrf.mxu0
    %v144 = vadd.f32 0.0, %v143
    %v145 = vpop.f32.mrf.mxu0
    %146 = vdwg.mxu0
    %v147 = vadd.f32 %v57, %v139
    %v148 = vadd.f32 %v58, %v144
    %vm149 = vcmask 785408
    %150 = vst.msk [vmem:[#allocation2] sm:$0xff] %vm149, %v147
    %151 = vst.msk [vmem:[#allocation2 + $0x8] sm:$0xff] %vm149, %v148
    // Predicated region
    $region26: #{tpu_custom_call.1} parent=1 // pred_check
      %p152 = pneg %p43
    $region27: #{tpu_custom_call.1} parent=1 // pred_check_branch
      %154 = sbr.rel (%p152) target = $region29
    $region28: #{tpu_custom_call.1} parent=1 // pred_region
      %v155 = vld [vmem:[#allocation2] sm:$0xff]
      %v156 = vld [vmem:[#allocation2 + $0x8] sm:$0xff]
      %157 = vst.msk [vmem:[#allocation8] sm:$0xff] %vm149, %v155
      %158 = vst.msk [vmem:[#allocation8 + $0x8] sm:$0xff] %vm149, %v156
    $region29: #{tpu_custom_call.1} parent=1 // pred_fallthru
      _
    // Predicated region
    $region30: #{tpu_custom_call.1} parent=1 // pred_check
      _
    $region31: #{tpu_custom_call.1} parent=1 // pred_check_branch
      %160 = sbr.rel (0) target = $region33
    $region32: #{tpu_custom_call.1} parent=1 // pred_region
      %s162 = ssub.s32 256, 256
      %163 = vsyncadd [#allocation5], %s162
      %s164 = sshll.u32 [#allocation8], 4
      %s165 = int_to_ptr.vmem [resolvable:$true] %s164
      %170 = dma.vmem_to_hbm [thread:$0]  %s165, 256, %s3, [#allocation5], 128, 128, 8
    $region33: #{tpu_custom_call.1} parent=1 // pred_fallthru
      _
    // Predicated region
    $region34: #{tpu_custom_call.1} parent=1 // pred_check
      _
    $region35: #{tpu_custom_call.1} parent=1 // pred_check_branch
      %172 = sbr.rel (0) target = $region37
    $region36: #{tpu_custom_call.1} parent=1 // pred_region
      %173 = dma.done [#allocation5], 256
    $region37: #{tpu_custom_call.1} parent=1 // pred_fallthru
      _
    %174 = vsyncpa [#allocation4], 1
    %175 = vsyncpa [#allocation7], 1
    %176 = vsyncpa [#allocation5], 1

</llo_original>
